<compile_context>
chip_gen: v6e
topology: v6e:2x2x1
jax: 0.10.0
libtpu: 0.0.40
codegen_flags: <defaults>
</compile_context>

<pallas_src>
import jax
import jax.numpy as jnp
from jax.experimental import pallas as pl
from jax.experimental.pallas import tpu as pltpu

# ----------------------------- model dims -----------------------------------
D_IN = 16     # in_config[0]['in']
H1 = 32       # in_config[0]['out'] == in_config[1]['in']
H2 = 24       # in_config[1]['out'] == in_config[2]['in']
Z = 8         # in_config[2]['out'] (latent)
NCOND = 1
BATCH = 16

D_PACK = Z + D_IN + NCOND          # 25: packed [eps | x | cond]
COND_ROW = Z + D_IN                # lane/row index of the condition column
D_OUT = D_IN + 2 * Z               # 32: packed [rec | mean | logvar]

# ------------------------ packed weight-slab layout --------------------------
# Every block is padded to a multiple of 8 rows (sublane tile) inside a 32-lane slab,
# so in-kernel static slices stay sublane-aligned. Total: 232 x 32 f32 ~= 29 KiB.
_WEIGHT_SHAPES = (
    ("we1p", (D_PACK, H1)),   # encoder L1, zero-padded to act on the whole packed input
    ("be1",  (1, H1)),
    ("we2",  (H1, H2)),
    ("be2",  (1, H2)),
    ("wh",   (H2, 2 * Z)),    # fused [mean | logvar] head
    ("bh",   (1, 2 * Z)),
    ("wd1z", (Z, H2)),        # decoder L1, z part
    ("wd1c", (D_PACK, H2)),   # decoder L1, cond part (zero except the cond row)
    ("bd1",  (1, H2)),
    ("wd2",  (H2, H1)),
    ("bd2",  (1, H1)),
    ("wd3",  (H1, D_IN)),
    ("bd3",  (1, D_IN)),
)


def _build_layout():
    layout = {}
    row = 0
    for name, (r, c) in _WEIGHT_SHAPES:
        layout[name] = (row, r, c)
        row += -(-r // 8) * 8      # pad each block to a multiple of 8 rows
    return layout, row


_W_LAYOUT, _W_ROWS = _build_layout()
_W_LANES = 32                      # widest packed matrix is H1 = 32 lanes


def _leaky(v):
    return jnp.where(v > 0, v, 0.2 * v)


# --------------------------------- kernel ------------------------------------
def vae2_kernel(in_ref, w_ref, out_ref):
    inp = in_ref[...]                           # (TB, 25) = [eps | x | cond]

    def wv(name):
        row, r, cc = _W_LAYOUT[name]
        return w_ref[row:row + r, :cc]          # static slice of the resident weight slab

    # ---- Encoder (whole packed tile; eps rows of we1p are zero) ----
    h1 = _leaky(jnp.dot(inp, wv("we1p"), preferred_element_type=jnp.float32) + wv("be1"))
    h2 = _leaky(jnp.dot(h1, wv("we2"), preferred_element_type=jnp.float32) + wv("be2"))
    heads = jnp.dot(h2, wv("wh"), preferred_element_type=jnp.float32) + wv("bh")

    # mean|logvar are already lane-adjacent: write them to the output slab now.
    out_ref[:, D_IN:] = heads.astype(out_ref.dtype)

    mean = heads[:, :Z]
    logvar = heads[:, Z:]
    eps = inp[:, :Z]                            # lane-aligned with mean (lanes 0..7)
    z = mean + eps * jnp.exp(0.5 * logvar)      # reparametrize

    # ---- Decoder ([z | cond] concat replaced by two MXU matmuls) ----
    d1 = jnp.maximum(
        jnp.dot(z, wv("wd1z"), preferred_element_type=jnp.float32)
        + jnp.dot(inp, wv("wd1c"), preferred_element_type=jnp.float32)
        + wv("bd1"),
        0.0)
    d2 = _leaky(jnp.dot(d1, wv("wd2"), preferred_element_type=jnp.float32) + wv("bd2"))
    rec = jnp.dot(d2, wv("wd3"), preferred_element_type=jnp.float32) + wv("bd3")

    out_ref[:, :D_IN] = rec.astype(out_ref.dtype)


# -------------------------------- wrapper -------------------------------------
def pack_weights(params):
    """Fuse heads, zero-pad we1/wd1 to packed-input rows, pack into one (232, 32) slab.

    Call ONCE per set of parameters; pass the returned slab to vae2_forward.
    """
    p = {k: jnp.asarray(v, jnp.float32) for k, v in params.items()}

    we1p = jnp.zeros((D_PACK, H1), jnp.float32)
    we1p = we1p.at[Z:Z + D_IN, :].set(p["we1"][:D_IN])       # x rows
    we1p = we1p.at[COND_ROW:, :].set(p["we1"][D_IN:])        # cond row

    wd1c = jnp.zeros((D_PACK, H2), jnp.float32)
    wd1c = wd1c.at[COND_ROW:, :].set(p["wd1"][Z:])           # cond row only

    fused = {
        "we1p": we1p, "be1": p["be1"], "we2": p["we2"], "be2": p["be2"],
        "wh": jnp.concatenate([p["wm"], p["wlv"]], axis=1),
        "bh": jnp.concatenate([p["bm"], p["blv"]], axis=1),
        "wd1z": p["wd1"][:Z], "wd1c": wd1c, "bd1": p["bd1"],
        "wd2": p["wd2"], "bd2": p["bd2"], "wd3": p["wd3"], "bd3": p["bd3"],
    }

    slab = jnp.zeros((_W_ROWS, _W_LANES), jnp.float32)
    for name, (r, c) in _WEIGHT_SHAPES:
        row = _W_LAYOUT[name][0]
        slab = slab.at[row:row + r, :c].set(fused[name])
    return slab


def _choose_block_b(B):
    """Single step for small batches; >=2 steps (v7x megacore) capped at 2048 rows
    (safe for v7x's 64 MiB VMEM / 32 MiB scoped default) for large batches."""
    if B <= 1024 or B % 8:
        return B
    bb = max(8, min(2048, (B // 2) // 8 * 8))
    while B % bb:
        bb -= 8
    return bb


@jax.jit
def vae2_forward(x, conditions, eps, w_slab):
    """Returns (rec_x, mean, logvar, conditions) — same as VAE2.forward.

    `eps` is the N(0,1) draw used for reparametrization (torch.randn_like(std)).
    `w_slab` is the pre-packed weight slab from pack_weights(params).
    """
    B = x.shape[0]
    block_b = _choose_block_b(B)

    # One packed input DMA per tile: [eps | x | cond].
    packed_in = jnp.concatenate(
        [eps.astype(jnp.float32), x.astype(jnp.float32), conditions.astype(jnp.float32)],
        axis=-1)

    out = pl.pallas_call(
        vae2_kernel,
        out_shape=jax.ShapeDtypeStruct((B, D_OUT), jnp.float32),
        grid_spec=pltpu.PrefetchScalarGridSpec(
            num_scalar_prefetch=0,
            grid=(B // block_b,),
            in_specs=[
                pl.BlockSpec((block_b, D_PACK), lambda i: (i, 0)),
                pl.BlockSpec((_W_ROWS, _W_LANES), lambda i: (0, 0)),
            ],
            out_specs=pl.BlockSpec((block_b, D_OUT), lambda i: (i, 0)),
        ),
        compiler_params=pltpu.CompilerParams(
            dimension_semantics=("parallel",),             # shards grid across v7x TCs
            vmem_limit_bytes=32 * 1024 * 1024,             # safe on v5e/v6e/v7x
        ),
    )(packed_in, w_slab)

    rec = out[:, :D_IN]
    mean = out[:, D_IN:D_IN + Z]
    logvar = out[:, D_IN + Z:]
    return rec, mean, logvar, conditions

# TODO(synk): for very large-B deployments, a transposed (features, B) lane-dense
# layout would remove the 128-lane padding on these <=32-wide activations entirely.


# ------------------------------ params & check --------------------------------
def init_params(key):
    """Deterministic parameter init (PyTorch-Linear-like uniform bounds)."""
    def linear(k, fan_in, fan_out):
        kw, kb = jax.random.split(k)
        bound = 1.0 / jnp.sqrt(fan_in)
        w = jax.random.uniform(kw, (fan_in, fan_out), jnp.float32, -bound, bound)
        b = jax.random.uniform(kb, (1, fan_out), jnp.float32, -bound, bound)
        return w, b

    keys = jax.random.split(key, 7)
    we1, be1 = linear(keys[0], D_IN + NCOND, H1)   # Linear(17, 32)
    we2, be2 = linear(keys[1], H1, H2)             # Linear(32, 24)
    wm, bm = linear(keys[2], H2, Z)                # mean head
    wlv, blv = linear(keys[3], H2, Z)              # logvar head
    wd1, bd1 = linear(keys[4], Z + NCOND, H2)      # Linear(9, 24)
    wd2, bd2 = linear(keys[5], H2, H1)             # Linear(24, 32)
    wd3, bd3 = linear(keys[6], H1, D_IN)           # Linear(32, 16)
    return dict(we1=we1, be1=be1, we2=we2, be2=be2, wm=wm, bm=bm, wlv=wlv, blv=blv,
                wd1=wd1, bd1=bd1, wd2=wd2, bd2=bd2, wd3=wd3, bd3=bd3)


def vae2_reference(x, c, eps, p):
    """Pure-JAX reference of VAE2.forward (eps supplied, matching the kernel)."""
    xc = jnp.concatenate([x, c], axis=-1)
    h1 = _leaky(xc @ p["we1"] + p["be1"])
    h2 = _leaky(h1 @ p["we2"] + p["be2"])
    mean = h2 @ p["wm"] + p["bm"]
    logvar = h2 @ p["wlv"] + p["blv"]
    z = mean + eps * jnp.exp(0.5 * logvar)
    zc = jnp.concatenate([z, c], axis=-1)
    d1 = jnp.maximum(zc @ p["wd1"] + p["bd1"], 0.0)
    d2 = _leaky(d1 @ p["wd2"] + p["bd2"])
    rec = d2 @ p["wd3"] + p["bd3"]
    return rec, mean, logvar


if __name__ == "__main__":
    key = jax.random.PRNGKey(0)
    k_x, k_c, k_eps, k_p = jax.random.split(key, 4)

    x = jax.random.normal(k_x, (BATCH, D_IN), jnp.float32)
    conditions = jax.random.normal(k_c, (BATCH, NCOND), jnp.float32)
    # eps for reparametrization (torch.randn_like(std)), drawn outside the kernel
    eps = jax.random.normal(k_eps, (BATCH, Z), jnp.float32)

    params = init_params(k_p)
    w_slab = jax.block_until_ready(pack_weights(params))   # packed once, reused per call

    rec_x, mean, logvar, cond_out = vae2_forward(x, conditions, eps, w_slab)
    jax.block_until_ready((rec_x, mean, logvar, cond_out))

    rec_ref, mean_ref, logvar_ref = vae2_reference(x, conditions, eps, params)

    assert rec_x.shape == (BATCH, D_IN)
    assert mean.shape == (BATCH, Z)
    assert logvar.shape == (BATCH, Z)
    assert cond_out.shape == (BATCH, NCOND)
    assert jnp.allclose(rec_x, rec_ref, atol=1e-4, rtol=1e-4)
    assert jnp.allclose(mean, mean_ref, atol=1e-4, rtol=1e-4)
    assert jnp.allclose(logvar, logvar_ref, atol=1e-4, rtol=1e-4)
    print("KERNEL_OK")
</pallas_src>

<mosaic_0001>
module attributes {stable_mosaic.version = 11 : i64} {
  func.func @vae2_kernel(%arg0: i32, %arg1: memref<16x25xf32, #tpu.memory_space<vmem>>, %arg2: memref<232x32xf32, #tpu.memory_space<vmem>>, %arg3: memref<16x32xf32, #tpu.memory_space<vmem>>) attributes {dimension_semantics = [#tpu.dimension_semantics<parallel>], iteration_bounds = array<i64: 1>, scalar_prefetch = 0 : i64, scratch_operands = 0 : i64, tpu.core_type = #tpu.core_type<tc>, window_params = [{transform_indices = @transform_0, window_bounds = array<i64: 16, 25>}, {pipeline_mode = #tpu.pipeline_mode<synchronous>, transform_indices = @transform_1, window_bounds = array<i64: 232, 32>}, {transform_indices = @transform_2, window_bounds = array<i64: 16, 32>}]} {
    %c0 = arith.constant 0 : index
    %c0_0 = arith.constant 0 : index
    %0 = vector.load %arg1[%c0, %c0_0] : memref<16x25xf32, #tpu.memory_space<vmem>>, vector<16x25xf32>
    %c0_1 = arith.constant 0 : index
    %c0_2 = arith.constant 0 : index
    %1 = vector.load %arg2[%c0_1, %c0_2] : memref<232x32xf32, #tpu.memory_space<vmem>>, vector<25x32xf32>
    %cst = arith.constant dense<0.000000e+00> : vector<16x32xf32>
    %2 = tpu.matmul %0, %1, %cst {dimension_numbers = #tpu.dot_dimension_numbers<[1], [0], [0], [1], [0, 0, 1, 1], [], []>} : vector<16x25xf32>, vector<25x32xf32>, vector<16x32xf32> -> vector<16x32xf32>
    %c32 = arith.constant 32 : index
    %c0_3 = arith.constant 0 : index
    %3 = vector.load %arg2[%c32, %c0_3] : memref<232x32xf32, #tpu.memory_space<vmem>>, vector<1x32xf32>
    %4 = vector.broadcast %3 : vector<1x32xf32> to vector<16x32xf32>
    %5 = arith.addf %2, %4 : vector<16x32xf32>
    %cst_4 = arith.constant 0.000000e+00 : f32
    %6 = vector.broadcast %cst_4 : f32 to vector<16x32xf32>
    %7 = arith.cmpf ogt, %5, %6 : vector<16x32xf32>
    %cst_5 = arith.constant 2.000000e-01 : f32
    %8 = vector.broadcast %cst_5 : f32 to vector<16x32xf32>
    %9 = arith.mulf %8, %5 : vector<16x32xf32>
    %10 = arith.select %7, %5, %9 : vector<16x32xi1>, vector<16x32xf32>
    %c40 = arith.constant 40 : index
    %c0_6 = arith.constant 0 : index
    %11 = vector.load %arg2[%c40, %c0_6] : memref<232x32xf32, #tpu.memory_space<vmem>>, vector<32x24xf32>
    %cst_7 = arith.constant dense<0.000000e+00> : vector<16x24xf32>
    %12 = tpu.matmul %10, %11, %cst_7 {dimension_numbers = #tpu.dot_dimension_numbers<[1], [0], [0], [1], [0, 0, 1, 1], [], []>} : vector<16x32xf32>, vector<32x24xf32>, vector<16x24xf32> -> vector<16x24xf32>
    %c72 = arith.constant 72 : index
    %c0_8 = arith.constant 0 : index
    %13 = vector.load %arg2[%c72, %c0_8] : memref<232x32xf32, #tpu.memory_space<vmem>>, vector<1x24xf32>
    %14 = vector.broadcast %13 : vector<1x24xf32> to vector<16x24xf32>
    %15 = arith.addf %12, %14 : vector<16x24xf32>
    %cst_9 = arith.constant 0.000000e+00 : f32
    %16 = vector.broadcast %cst_9 : f32 to vector<16x24xf32>
    %17 = arith.cmpf ogt, %15, %16 : vector<16x24xf32>
    %cst_10 = arith.constant 2.000000e-01 : f32
    %18 = vector.broadcast %cst_10 : f32 to vector<16x24xf32>
    %19 = arith.mulf %18, %15 : vector<16x24xf32>
    %20 = arith.select %17, %15, %19 : vector<16x24xi1>, vector<16x24xf32>
    %c80 = arith.constant 80 : index
    %c0_11 = arith.constant 0 : index
    %21 = vector.load %arg2[%c80, %c0_11] : memref<232x32xf32, #tpu.memory_space<vmem>>, vector<24x16xf32>
    %cst_12 = arith.constant dense<0.000000e+00> : vector<16x16xf32>
    %22 = tpu.matmul %20, %21, %cst_12 {dimension_numbers = #tpu.dot_dimension_numbers<[1], [0], [0], [1], [0, 0, 1, 1], [], []>} : vector<16x24xf32>, vector<24x16xf32>, vector<16x16xf32> -> vector<16x16xf32>
    %c104 = arith.constant 104 : index
    %c0_13 = arith.constant 0 : index
    %23 = vector.load %arg2[%c104, %c0_13] : memref<232x32xf32, #tpu.memory_space<vmem>>, vector<1x16xf32>
    %24 = vector.broadcast %23 : vector<1x16xf32> to vector<16x16xf32>
    %25 = arith.addf %22, %24 : vector<16x16xf32>
    %c0_14 = arith.constant 0 : index
    %c16 = arith.constant 16 : index
    %26 = vector.load %arg3[%c0_14, %c16] : memref<16x32xf32, #tpu.memory_space<vmem>>, vector<16x16xf32>
    tpu.vector_store %arg3[%c0_14, %c16], %25 {strides = array<i32>} : memref<16x32xf32, #tpu.memory_space<vmem>>, vector<16x16xf32>,
    %27 = vector.extract_strided_slice %25 {offsets = [0, 0], sizes = [16, 8], strides = [1, 1]} : vector<16x16xf32> to vector<16x8xf32>
    %28 = vector.extract_strided_slice %25 {offsets = [0, 8], sizes = [16, 8], strides = [1, 1]} : vector<16x16xf32> to vector<16x8xf32>
    %29 = vector.extract_strided_slice %0 {offsets = [0, 0], sizes = [16, 8], strides = [1, 1]} : vector<16x25xf32> to vector<16x8xf32>
    %cst_15 = arith.constant 5.000000e-01 : f32
    %30 = vector.broadcast %cst_15 : f32 to vector<16x8xf32>
    %31 = arith.mulf %30, %28 : vector<16x8xf32>
    %32 = math.exp %31 : vector<16x8xf32>
    %33 = arith.mulf %29, %32 : vector<16x8xf32>
    %34 = arith.addf %27, %33 : vector<16x8xf32>
    %c112 = arith.constant 112 : index
    %c0_16 = arith.constant 0 : index
    %35 = vector.load %arg2[%c112, %c0_16] : memref<232x32xf32, #tpu.memory_space<vmem>>, vector<8x24xf32>
    %cst_17 = arith.constant dense<0.000000e+00> : vector<16x24xf32>
    %36 = tpu.matmul %34, %35, %cst_17 {dimension_numbers = #tpu.dot_dimension_numbers<[1], [0], [0], [1], [0, 0, 1, 1], [], []>} : vector<16x8xf32>, vector<8x24xf32>, vector<16x24xf32> -> vector<16x24xf32>
    %c120 = arith.constant 120 : index
    %c0_18 = arith.constant 0 : index
    %37 = vector.load %arg2[%c120, %c0_18] : memref<232x32xf32, #tpu.memory_space<vmem>>, vector<25x24xf32>
    %cst_19 = arith.constant dense<0.000000e+00> : vector<16x24xf32>
    %38 = tpu.matmul %0, %37, %cst_19 {dimension_numbers = #tpu.dot_dimension_numbers<[1], [0], [0], [1], [0, 0, 1, 1], [], []>} : vector<16x25xf32>, vector<25x24xf32>, vector<16x24xf32> -> vector<16x24xf32>
    %39 = arith.addf %36, %38 : vector<16x24xf32>
    %c152 = arith.constant 152 : index
    %c0_20 = arith.constant 0 : index
    %40 = vector.load %arg2[%c152, %c0_20] : memref<232x32xf32, #tpu.memory_space<vmem>>, vector<1x24xf32>
    %41 = vector.broadcast %40 : vector<1x24xf32> to vector<16x24xf32>
    %42 = arith.addf %39, %41 : vector<16x24xf32>
    %cst_21 = arith.constant 0.000000e+00 : f32
    %43 = vector.broadcast %cst_21 : f32 to vector<16x24xf32>
    %44 = arith.maximumf %42, %43 : vector<16x24xf32>
    %c160 = arith.constant 160 : index
    %c0_22 = arith.constant 0 : index
    %45 = vector.load %arg2[%c160, %c0_22] : memref<232x32xf32, #tpu.memory_space<vmem>>, vector<24x32xf32>
    %cst_23 = arith.constant dense<0.000000e+00> : vector<16x32xf32>
    %46 = tpu.matmul %44, %45, %cst_23 {dimension_numbers = #tpu.dot_dimension_numbers<[1], [0], [0], [1], [0, 0, 1, 1], [], []>} : vector<16x24xf32>, vector<24x32xf32>, vector<16x32xf32> -> vector<16x32xf32>
    %c184 = arith.constant 184 : index
    %c0_24 = arith.constant 0 : index
    %47 = vector.load %arg2[%c184, %c0_24] : memref<232x32xf32, #tpu.memory_space<vmem>>, vector<1x32xf32>
    %48 = vector.broadcast %47 : vector<1x32xf32> to vector<16x32xf32>
    %49 = arith.addf %46, %48 : vector<16x32xf32>
    %cst_25 = arith.constant 0.000000e+00 : f32
    %50 = vector.broadcast %cst_25 : f32 to vector<16x32xf32>
    %51 = arith.cmpf ogt, %49, %50 : vector<16x32xf32>
    %cst_26 = arith.constant 2.000000e-01 : f32
    %52 = vector.broadcast %cst_26 : f32 to vector<16x32xf32>
    %53 = arith.mulf %52, %49 : vector<16x32xf32>
    %54 = arith.select %51, %49, %53 : vector<16x32xi1>, vector<16x32xf32>
    %c192 = arith.constant 192 : index
    %c0_27 = arith.constant 0 : index
    %55 = vector.load %arg2[%c192, %c0_27] : memref<232x32xf32, #tpu.memory_space<vmem>>, vector<32x16xf32>
    %cst_28 = arith.constant dense<0.000000e+00> : vector<16x16xf32>
    %56 = tpu.matmul %54, %55, %cst_28 {dimension_numbers = #tpu.dot_dimension_numbers<[1], [0], [0], [1], [0, 0, 1, 1], [], []>} : vector<16x32xf32>, vector<32x16xf32>, vector<16x16xf32> -> vector<16x16xf32>
    %c224 = arith.constant 224 : index
    %c0_29 = arith.constant 0 : index
    %57 = vector.load %arg2[%c224, %c0_29] : memref<232x32xf32, #tpu.memory_space<vmem>>, vector<1x16xf32>
    %58 = vector.broadcast %57 : vector<1x16xf32> to vector<16x16xf32>
    %59 = arith.addf %56, %58 : vector<16x16xf32>
    %c0_30 = arith.constant 0 : index
    %c0_31 = arith.constant 0 : index
    %60 = vector.load %arg3[%c0_30, %c0_31] : memref<16x32xf32, #tpu.memory_space<vmem>>, vector<16x16xf32>
    tpu.vector_store %arg3[%c0_30, %c0_31], %59 {strides = array<i32>} : memref<16x32xf32, #tpu.memory_space<vmem>>, vector<16x16xf32>,
    return
  }
  func.func @transform_0(%arg0: i32) -> (i32, i32) {
    %c0_i32 = arith.constant 0 : i32
    %c0_i32_0 = arith.constant 0 : i32
    return %arg0, %c0_i32 : i32, i32
  }
  func.func @transform_1(%arg0: i32) -> (i32, i32) {
    %c0_i32 = arith.constant 0 : i32
    %c0_i32_0 = arith.constant 0 : i32
    %c0_i32_1 = arith.constant 0 : i32
    return %c0_i32, %c0_i32_0 : i32, i32
  }
  func.func @transform_2(%arg0: i32) -> (i32, i32) {
    %c0_i32 = arith.constant 0 : i32
    %c0_i32_0 = arith.constant 0 : i32
    return %arg0, %c0_i32 : i32, i32
  }
}

</mosaic_0001>

<llo_original>
// kernel: vae2_forward.1
$region0: #{vae2_forward.1}
  #allocation0 [shape = 'u32[]', space=smem, size = 0x4, offset = 0x4, fixed_abs, tag = 'smem constant byte address 0x4 - core index']
  #allocation1 [shape = 'u32[144,128]{1,0:T(1,128)}', space=vmem, size = 0x12000, scoped, tag = 'internal scratch']
  %s0 = inlined_call_operand.vmem [shape: f32[16,25], index: 0, kind: input, shape index: {}]
  %s1 = inlined_call_operand.vmem [shape: f32[232,32], index: 1, kind: input, shape index: {}]
  %s2 = inlined_call_operand.vmem [shape: f32[16,32], index: 2, kind: output, shape index: {}]
  %s3 = sld [smem:[#allocation0]]
  $region18: #{vae2_forward.1} parent=0
    _
  %s5 = ssub.s32 1, %s3
  %s6 = scalar_select 0, %s5, %s3
  // Predicated region
  $region2: #{vae2_forward.1} parent=0 // pred_check
    _
  $region3: #{vae2_forward.1} parent=0 // pred_check_branch
    %8 = sbr.rel (0) target = $region5
  $region4: #{vae2_forward.1} parent=0 // pred_region
    _
  $region5: #{vae2_forward.1} parent=0 // pred_fallthru
    _
  // Predicated region
  $region6: #{vae2_forward.1} parent=0 // pred_check
    _
  $region7: #{vae2_forward.1} parent=0 // pred_check_branch
    %10 = sbr.rel (0) target = $region9
  $region8: #{vae2_forward.1} parent=0 // pred_region
    _
  $region9: #{vae2_forward.1} parent=0 // pred_fallthru
    _
  %v11 = vld [vmem:[%s0] sm:$0xff]
  %v12 = vld [vmem:[%s0 + $0x8] sm:$0xff]
  %v13 = vld [vmem:[%s1] sm:$0xff]
  %v14 = vld [vmem:[%s1 + $0x8] sm:$0xff]
  %v15 = vld [vmem:[%s1 + $0x10] sm:$0xff]
  %v16 = vld [vmem:[%s1 + $0x18] sm:$0x1]
  %v17 = vld [vmem:[%s1 + $0x20] sm:$0x1]
  %v18 = vlaneseq
  %v19 = vshrl.u32 %v18, 7
  %v20 = vsub.s32 0, %v19
  %v21 = vrot.slane %v17, %v20
  %vm22 = vcmask 203776
  %v24 = vsel %vm22, %v11, 0
  %v27 = vsel %vm22, %v12, 0
  %vm29 = vcmask 1040384
  %v31 = vsel %vm29, %v16, 0
  %33 = vmatprep.subr.mxu0 0.0
  %34 = vmatpush1.msra.mxu0 0.0
  %35 = vmatprep.subr.mxu0 0.0
  %36 = vmatpush1.msra.mxu0 0.0
  %37 = vmatprep.subr.mxu0 0.0
  %38 = vmatpush1.msra.mxu0 0.0
  %39 = vmatprep.subr.mxu0 0.0
  %40 = vmatpush1.msra.mxu0 0.0
  %41 = vmatprep.subr.mxu0 0.0
  %42 = vmatpush1.msra.mxu0 0.0
  %43 = vmatprep.subr.mxu0 0.0
  %44 = vmatpush1.msra.mxu0 0.0
  %45 = vmatprep.subr.mxu0 0.0
  %46 = vmatpush1.msra.mxu0 0.0
  %47 = vmatprep.subr.mxu0 0.0
  %48 = vmatpush1.msra.mxu0 0.0
  %49 = vmatprep.subr.mxu0 0.0
  %50 = vmatpush1.msra.mxu0 0.0
  %51 = vmatprep.subr.mxu0 0.0
  %52 = vmatpush1.msra.mxu0 0.0
  %53 = vmatprep.subr.mxu0 0.0
  %54 = vmatpush1.msra.mxu0 0.0
  %55 = vmatprep.subr.mxu0 0.0
  %56 = vmatpush1.msra.mxu0 0.0
  %57 = vmatprep.subr.mxu0 0.0
  %58 = vmatpush1.msra.mxu0 %v31
  %59 = vmatprep.subr.mxu0 0.0
  %60 = vmatpush1.msra.mxu0 %v15
  %61 = vmatprep.subr.mxu0 0.0
  %62 = vmatpush1.msra.mxu0 %v14
  %63 = vmatprep.subr.mxu0 0.0
  %64 = vmatpush1.msra.mxu0 %v13
  %65 = vmatprep.subr.mxu0 0.0
  %66 = vmatpush2.msra.mxu0 0.0
  %67 = vmatprep.subr.mxu0 0.0
  %68 = vmatpush2.msra.mxu0 0.0
  %69 = vmatprep.subr.mxu0 0.0
  %70 = vmatpush2.msra.mxu0 0.0
  %71 = vmatprep.subr.mxu0 0.0
  %72 = vmatpush2.msra.mxu0 0.0
  %73 = vmatprep.subr.mxu0 0.0
  %74 = vmatpush2.msra.mxu0 0.0
  %75 = vmatprep.subr.mxu0 0.0
  %76 = vmatpush2.msra.mxu0 0.0
  %77 = vmatprep.subr.mxu0 0.0
  %78 = vmatpush2.msra.mxu0 0.0
  %79 = vmatprep.subr.mxu0 0.0
  %80 = vmatpush2.msra.mxu0 0.0
  %81 = vmatprep.subr.mxu0 0.0
  %82 = vmatpush2.msra.mxu0 0.0
  %83 = vmatprep.subr.mxu0 0.0
  %84 = vmatpush2.msra.mxu0 0.0
  %85 = vmatprep.subr.mxu0 0.0
  %86 = vmatpush2.msra.mxu0 0.0
  %87 = vmatprep.subr.mxu0 0.0
  %88 = vmatpush2.msra.mxu0 0.0
  %89 = vmatprep.subr.mxu0 0.0
  %90 = vmatpush2.msra.mxu0 0.0
  %91 = vmatprep.subr.mxu0 0.0
  %92 = vmatpush2.msra.mxu0 0.0
  %93 = vmatprep.subr.mxu0 0.0
  %94 = vmatpush2.msra.mxu0 0.0
  %95 = vmatprep.subr.mxu0 0.0
  %96 = vmatpush2.msra.mxu0 0.0
  %97 = vmatprep.mubr.f32.mxu0 0.0
  %98 = vmatmul.mubr.f32.gmra.mxu0 %v24
  %v99 = vpop.f32.mrf.mxu0
  %v100 = vadd.f32 %v21, %v99
  %v101 = vpop.f32.mrf.mxu0
  %102 = vmatprep.mubr.f32.mxu0 0.0
  %103 = vmatmul.mubr.f32.gmra.mxu0 %v27
  %v104 = vpop.f32.mrf.mxu0
  %v105 = vadd.f32 %v21, %v104
  %v106 = vpop.f32.mrf.mxu0
  %107 = vdwg.mxu0
  %vm108 = vcmp.gt.f32.partialorder %v100, 0.0
  %vm109 = vcmp.gt.f32.partialorder %v105, 0.0
  %v110 = vmul.f32 %v100, 0.2
  %v111 = vmul.f32 %v105, 0.2
  %v112 = vsel %vm108, %v100, %v110
  %v113 = vsel %vm109, %v105, %v111
  %v114 = vld [vmem:[%s1 + $0x28] sm:$0xff]
  %v115 = vld [vmem:[%s1 + $0x30] sm:$0xff]
  %v116 = vld [vmem:[%s1 + $0x38] sm:$0xff]
  %v117 = vld [vmem:[%s1 + $0x40] sm:$0xff]
  %v118 = vld [vmem:[%s1 + $0x48] sm:$0x1]
  %v119 = vlaneseq
  %v120 = vshrl.u32 %v119, 7
  %v121 = vsub.s32 0, %v120
  %v122 = vrot.slane %v118, %v121
  %vm123 = vcmask 261120
  %v125 = vsel %vm123, %v112, 0
  %v128 = vsel %vm123, %v113, 0
  %130 = vmatprep.subr.mxu0 0.0
  %131 = vmatpush1.msra.mxu0 0.0
  %132 = vmatprep.subr.mxu0 0.0
  %133 = vmatpush1.msra.mxu0 0.0
  %134 = vmatprep.subr.mxu0 0.0
  %135 = vmatpush1.msra.mxu0 0.0
  %136 = vmatprep.subr.mxu0 0.0
  %137 = vmatpush1.msra.mxu0 0.0
  %138 = vmatprep.subr.mxu0 0.0
  %139 = vmatpush1.msra.mxu0 0.0
  %140 = vmatprep.subr.mxu0 0.0
  %141 = vmatpush1.msra.mxu0 0.0
  %142 = vmatprep.subr.mxu0 0.0
  %143 = vmatpush1.msra.mxu0 0.0
  %144 = vmatprep.subr.mxu0 0.0
  %145 = vmatpush1.msra.mxu0 0.0
  %146 = vmatprep.subr.mxu0 0.0
  %147 = vmatpush1.msra.mxu0 0.0
  %148 = vmatprep.subr.mxu0 0.0
  %149 = vmatpush1.msra.mxu0 0.0
  %150 = vmatprep.subr.mxu0 0.0
  %151 = vmatpush1.msra.mxu0 0.0
  %152 = vmatprep.subr.mxu0 0.0
  %153 = vmatpush1.msra.mxu0 0.0
  %154 = vmatprep.subr.mxu0 0.0
  %155 = vmatpush1.msra.mxu0 %v117
  %156 = vmatprep.subr.mxu0 0.0
  %157 = vmatpush1.msra.mxu0 %v116
  %158 = vmatprep.subr.mxu0 0.0
  %159 = vmatpush1.msra.mxu0 %v115
  %160 = vmatprep.subr.mxu0 0.0
  %161 = vmatpush1.msra.mxu0 %v114
  %162 = vmatprep.subr.mxu0 0.0
  %163 = vmatpush2.msra.mxu0 0.0
  %164 = vmatprep.subr.mxu0 0.0
  %165 = vmatpush2.msra.mxu0 0.0
  %166 = vmatprep.subr.mxu0 0.0
  %167 = vmatpush2.msra.mxu0 0.0
  %168 = vmatprep.subr.mxu0 0.0
  %169 = vmatpush2.msra.mxu0 0.0
  %170 = vmatprep.subr.mxu0 0.0
  %171 = vmatpush2.msra.mxu0 0.0
  %172 = vmatprep.subr.mxu0 0.0
  %173 = vmatpush2.msra.mxu0 0.0
  %174 = vmatprep.subr.mxu0 0.0
  %175 = vmatpush2.msra.mxu0 0.0
  %176 = vmatprep.subr.mxu0 0.0
  %177 = vmatpush2.msra.mxu0 0.0
  %178 = vmatprep.subr.mxu0 0.0
  %179 = vmatpush2.msra.mxu0 0.0
  %180 = vmatprep.subr.mxu0 0.0
  %181 = vmatpush2.msra.mxu0 0.0
  %182 = vmatprep.subr.mxu0 0.0
  %183 = vmatpush2.msra.mxu0 0.0
  %184 = vmatprep.subr.mxu0 0.0
  %185 = vmatpush2.msra.mxu0 0.0
  %186 = vmatprep.subr.mxu0 0.0
  %187 = vmatpush2.msra.mxu0 0.0
  %188 = vmatprep.subr.mxu0 0.0
  %189 = vmatpush2.msra.mxu0 0.0
  %190 = vmatprep.subr.mxu0 0.0
  %191 = vmatpush2.msra.mxu0 0.0
  %192 = vmatprep.subr.mxu0 0.0
  %193 = vmatpush2.msra.mxu0 0.0
  %194 = vmatprep.mubr.f32.mxu0 0.0
  %195 = vmatmul.mubr.f32.gmra.mxu0 %v125
  %v196 = vpop.f32.mrf.mxu0
  %v197 = vadd.f32 %v122, %v196
  %v198 = vpop.f32.mrf.mxu0
  %199 = vmatprep.mubr.f32.mxu0 0.0
  %200 = vmatmul.mubr.f32.gmra.mxu0 %v128
  %v201 = vpop.f32.mrf.mxu0
  %v202 = vadd.f32 %v122, %v201
  %v203 = vpop.f32.mrf.mxu0
  %204 = vdwg.mxu0
  %vm205 = vcmp.gt.f32.partialorder %v197, 0.0
  %vm206 = vcmp.gt.f32.partialorder %v202, 0.0
  %v207 = vmul.f32 %v197, 0.2
  %v208 = vmul.f32 %v202, 0.2
  %v209 = vsel %vm205, %v197, %v207
  %v210 = vsel %vm206, %v202, %v208
  %v211 = vld [vmem:[%s1 + $0x50] sm:$0xff]
  %v212 = vld [vmem:[%s1 + $0x58] sm:$0xff]
  %v213 = vld [vmem:[%s1 + $0x60] sm:$0xff]
  %v214 = vld [vmem:[%s1 + $0x68] sm:$0x1]
  %v215 = vlaneseq
  %v216 = vshrl.u32 %v215, 7
  %v217 = vsub.s32 0, %v216
  %v218 = vrot.slane %v214, %v217
  %vm219 = vcmask 195584
  %v221 = vsel %vm219, %v209, 0
  %v224 = vsel %vm219, %v210, 0
  %226 = vmatprep.subr.mxu0 0.0
  %227 = vmatpush1.msra.mxu0 0.0
  %228 = vmatprep.subr.mxu0 0.0
  %229 = vmatpush1.msra.mxu0 0.0
  %230 = vmatprep.subr.mxu0 0.0
  %231 = vmatpush1.msra.mxu0 0.0
  %232 = vmatprep.subr.mxu0 0.0
  %233 = vmatpush1.msra.mxu0 0.0
  %234 = vmatprep.subr.mxu0 0.0
  %235 = vmatpush1.msra.mxu0 0.0
  %236 = vmatprep.subr.mxu0 0.0
  %237 = vmatpush1.msra.mxu0 0.0
  %238 = vmatprep.subr.mxu0 0.0
  %239 = vmatpush1.msra.mxu0 0.0
  %240 = vmatprep.subr.mxu0 0.0
  %241 = vmatpush1.msra.mxu0 0.0
  %242 = vmatprep.subr.mxu0 0.0
  %243 = vmatpush1.msra.mxu0 0.0
  %244 = vmatprep.subr.mxu0 0.0
  %245 = vmatpush1.msra.mxu0 0.0
  %246 = vmatprep.subr.mxu0 0.0
  %247 = vmatpush1.msra.mxu0 0.0
  %248 = vmatprep.subr.mxu0 0.0
  %249 = vmatpush1.msra.mxu0 0.0
  %250 = vmatprep.subr.mxu0 0.0
  %251 = vmatpush1.msra.mxu0 0.0
  %252 = vmatprep.subr.mxu0 0.0
  %253 = vmatpush1.msra.mxu0 %v213
  %254 = vmatprep.subr.mxu0 0.0
  %255 = vmatpush1.msra.mxu0 %v212
  %256 = vmatprep.subr.mxu0 0.0
  %257 = vmatpush1.msra.mxu0 %v211
  %258 = vmatprep.subr.mxu0 0.0
  %259 = vmatpush2.msra.mxu0 0.0
  %260 = vmatprep.subr.mxu0 0.0
  %261 = vmatpush2.msra.mxu0 0.0
  %262 = vmatprep.subr.mxu0 0.0
  %263 = vmatpush2.msra.mxu0 0.0
  %264 = vmatprep.subr.mxu0 0.0
  %265 = vmatpush2.msra.mxu0 0.0
  %266 = vmatprep.subr.mxu0 0.0
  %267 = vmatpush2.msra.mxu0 0.0
  %268 = vmatprep.subr.mxu0 0.0
  %269 = vmatpush2.msra.mxu0 0.0
  %270 = vmatprep.subr.mxu0 0.0
  %271 = vmatpush2.msra.mxu0 0.0
  %272 = vmatprep.subr.mxu0 0.0
  %273 = vmatpush2.msra.mxu0 0.0
  %274 = vmatprep.subr.mxu0 0.0
  %275 = vmatpush2.msra.mxu0 0.0
  %276 = vmatprep.subr.mxu0 0.0
  %277 = vmatpush2.msra.mxu0 0.0
  %278 = vmatprep.subr.mxu0 0.0
  %279 = vmatpush2.msra.mxu0 0.0
  %280 = vmatprep.subr.mxu0 0.0
  %281 = vmatpush2.msra.mxu0 0.0
  %282 = vmatprep.subr.mxu0 0.0
  %283 = vmatpush2.msra.mxu0 0.0
  %284 = vmatprep.subr.mxu0 0.0
  %285 = vmatpush2.msra.mxu0 0.0
  %286 = vmatprep.subr.mxu0 0.0
  %287 = vmatpush2.msra.mxu0 0.0
  %288 = vmatprep.subr.mxu0 0.0
  %289 = vmatpush2.msra.mxu0 0.0
  %290 = vmatprep.mubr.f32.mxu0 0.0
  %291 = vmatmul.mubr.f32.gmra.mxu0 %v221
  %v292 = vpop.f32.mrf.mxu0
  %v293 = vadd.f32 %v218, %v292
  %v294 = vpop.f32.mrf.mxu0
  %295 = vmatprep.mubr.f32.mxu0 0.0
  %296 = vmatmul.mubr.f32.gmra.mxu0 %v224
  %v297 = vpop.f32.mrf.mxu0
  %v298 = vadd.f32 %v218, %v297
  %v299 = vpop.f32.mrf.mxu0
  %300 = vdwg.mxu0
  %303 = vrot.lane.b32.xlu0 %v293, 16
  %v304 = vpop.permute.xlu0 %303
  %305 = vrot.lane.b32.xlu0 %v298, 16
  %v306 = vpop.permute.xlu0 %305
  %vm309 = vcmask 261248
  %310 = vst.msk [vmem:[%s2] sm:$0xff] %vm309, %v304
  %311 = vst.msk [vmem:[%s2 + $0x8] sm:$0xff] %vm309, %v306
  %v312 = vmul.f32 %v293, 0.5
  %v313 = vmul.f32 %v298, 0.5
  %v314 = vmul.f32 %v312, 1.442695
  %v315 = vpow.pop %v314
  %v316 = vmul.f32 %v313, 1.442695
  %v317 = vpow.pop %v316
  %320 = vrot.lane.b32.xlu0 %v315, 120
  %v321 = vpop.permute.xlu0 %320
  %322 = vrot.lane.b32.xlu0 %v317, 120
  %v323 = vpop.permute.xlu0 %322
  %v326 = vmul.f32 %v11, %v321
  %v327 = vmul.f32 %v12, %v323
  %v328 = vadd.f32 %v293, %v326
  %v329 = vadd.f32 %v298, %v327
  %v330 = vld [vmem:[%s1 + $0x70] sm:$0xff]
  %v331 = vld [vmem:[%s1 + $0x78] sm:$0xff]
  %v332 = vld [vmem:[%s1 + $0x80] sm:$0xff]
  %v333 = vld [vmem:[%s1 + $0x88] sm:$0xff]
  %v334 = vld [vmem:[%s1 + $0x90] sm:$0x1]
  %v336 = vsel %vm29, %v334, 0
  %338 = vmatprep.subr.mxu0 0.0
  %339 = vmatpush1.msra.mxu0 0.0
  %340 = vmatprep.subr.mxu0 0.0
  %341 = vmatpush1.msra.mxu0 0.0
  %342 = vmatprep.subr.mxu0 0.0
  %343 = vmatpush1.msra.mxu0 0.0
  %344 = vmatprep.subr.mxu0 0.0
  %345 = vmatpush1.msra.mxu0 0.0
  %346 = vmatprep.subr.mxu0 0.0
  %347 = vmatpush1.msra.mxu0 0.0
  %348 = vmatprep.subr.mxu0 0.0
  %349 = vmatpush1.msra.mxu0 0.0
  %350 = vmatprep.subr.mxu0 0.0
  %351 = vmatpush1.msra.mxu0 0.0
  %352 = vmatprep.subr.mxu0 0.0
  %353 = vmatpush1.msra.mxu0 0.0
  %354 = vmatprep.subr.mxu0 0.0
  %355 = vmatpush1.msra.mxu0 0.0
  %356 = vmatprep.subr.mxu0 0.0
  %357 = vmatpush1.msra.mxu0 0.0
  %358 = vmatprep.subr.mxu0 0.0
  %359 = vmatpush1.msra.mxu0 0.0
  %360 = vmatprep.subr.mxu0 0.0
  %361 = vmatpush1.msra.mxu0 0.0
  %362 = vmatprep.subr.mxu0 0.0
  %363 = vmatpush1.msra.mxu0 %v336
  %364 = vmatprep.subr.mxu0 0.0
  %365 = vmatpush1.msra.mxu0 %v333
  %366 = vmatprep.subr.mxu0 0.0
  %367 = vmatpush1.msra.mxu0 %v332
  %368 = vmatprep.subr.mxu0 0.0
  %369 = vmatpush1.msra.mxu0 %v331
  %370 = vmatprep.subr.mxu0 0.0
  %371 = vmatpush2.msra.mxu0 0.0
  %372 = vmatprep.subr.mxu0 0.0
  %373 = vmatpush2.msra.mxu0 0.0
  %374 = vmatprep.subr.mxu0 0.0
  %375 = vmatpush2.msra.mxu0 0.0
  %376 = vmatprep.subr.mxu0 0.0
  %377 = vmatpush2.msra.mxu0 0.0
  %378 = vmatprep.subr.mxu0 0.0
  %379 = vmatpush2.msra.mxu0 0.0
  %380 = vmatprep.subr.mxu0 0.0
  %381 = vmatpush2.msra.mxu0 0.0
  %382 = vmatprep.subr.mxu0 0.0
  %383 = vmatpush2.msra.mxu0 0.0
  %384 = vmatprep.subr.mxu0 0.0
  %385 = vmatpush2.msra.mxu0 0.0
  %386 = vmatprep.subr.mxu0 0.0
  %387 = vmatpush2.msra.mxu0 0.0
  %388 = vmatprep.subr.mxu0 0.0
  %389 = vmatpush2.msra.mxu0 0.0
  %390 = vmatprep.subr.mxu0 0.0
  %391 = vmatpush2.msra.mxu0 0.0
  %392 = vmatprep.subr.mxu0 0.0
  %393 = vmatpush2.msra.mxu0 0.0
  %394 = vmatprep.subr.mxu0 0.0
  %395 = vmatpush2.msra.mxu0 0.0
  %396 = vmatprep.subr.mxu0 0.0
  %397 = vmatpush2.msra.mxu0 0.0
  %398 = vmatprep.subr.mxu0 0.0
  %399 = vmatpush2.msra.mxu0 0.0
  %400 = vmatprep.subr.mxu0 0.0
  %401 = vmatpush2.msra.mxu0 0.0
  %402 = vmatprep.mubr.f32.mxu0 0.0
  %403 = vmatmul.mubr.f32.gmra.mxu0 %v24
  %v404 = vpop.f32.mrf.mxu0
  %v405 = vadd.f32 0.0, %v404
  %v406 = vpop.f32.mrf.mxu0
  %407 = vmatprep.mubr.f32.mxu0 0.0
  %408 = vmatmul.mubr.f32.gmra.mxu0 %v27
  %v409 = vpop.f32.mrf.mxu0
  %v410 = vadd.f32 0.0, %v409
  %v411 = vpop.f32.mrf.mxu0
  %412 = vdwg.mxu0
  %vm413 = vcmask 64512
  %v415 = vsel %vm413, %v328, 0
  %v418 = vsel %vm413, %v329, 0
  %420 = vmatprep.subr.mxu0 0.0
  %421 = vmatpush1.msra.mxu0 0.0
  %422 = vmatprep.subr.mxu0 0.0
  %423 = vmatpush1.msra.mxu0 0.0
  %424 = vmatprep.subr.mxu0 0.0
  %425 = vmatpush1.msra.mxu0 0.0
  %426 = vmatprep.subr.mxu0 0.0
  %427 = vmatpush1.msra.mxu0 0.0
  %428 = vmatprep.subr.mxu0 0.0
  %429 = vmatpush1.msra.mxu0 0.0
  %430 = vmatprep.subr.mxu0 0.0
  %431 = vmatpush1.msra.mxu0 0.0
  %432 = vmatprep.subr.mxu0 0.0
  %433 = vmatpush1.msra.mxu0 0.0
  %434 = vmatprep.subr.mxu0 0.0
  %435 = vmatpush1.msra.mxu0 0.0
  %436 = vmatprep.subr.mxu0 0.0
  %437 = vmatpush1.msra.mxu0 0.0
  %438 = vmatprep.subr.mxu0 0.0
  %439 = vmatpush1.msra.mxu0 0.0
  %440 = vmatprep.subr.mxu0 0.0
  %441 = vmatpush1.msra.mxu0 0.0
  %442 = vmatprep.subr.mxu0 0.0
  %443 = vmatpush1.msra.mxu0 0.0
  %444 = vmatprep.subr.mxu0 0.0
  %445 = vmatpush1.msra.mxu0 0.0
  %446 = vmatprep.subr.mxu0 0.0
  %447 = vmatpush1.msra.mxu0 0.0
  %448 = vmatprep.subr.mxu0 0.0
  %449 = vmatpush1.msra.mxu0 0.0
  %450 = vmatprep.subr.mxu0 0.0
  %451 = vmatpush1.msra.mxu0 %v330
  %452 = vmatprep.subr.mxu0 0.0
  %453 = vmatpush2.msra.mxu0 0.0
  %454 = vmatprep.subr.mxu0 0.0
  %455 = vmatpush2.msra.mxu0 0.0
  %456 = vmatprep.subr.mxu0 0.0
  %457 = vmatpush2.msra.mxu0 0.0
  %458 = vmatprep.subr.mxu0 0.0
  %459 = vmatpush2.msra.mxu0 0.0
  %460 = vmatprep.subr.mxu0 0.0
  %461 = vmatpush2.msra.mxu0 0.0
  %462 = vmatprep.subr.mxu0 0.0
  %463 = vmatpush2.msra.mxu0 0.0
  %464 = vmatprep.subr.mxu0 0.0
  %465 = vmatpush2.msra.mxu0 0.0
  %466 = vmatprep.subr.mxu0 0.0
  %467 = vmatpush2.msra.mxu0 0.0
  %468 = vmatprep.subr.mxu0 0.0
  %469 = vmatpush2.msra.mxu0 0.0
  %470 = vmatprep.subr.mxu0 0.0
  %471 = vmatpush2.msra.mxu0 0.0
  %472 = vmatprep.subr.mxu0 0.0
  %473 = vmatpush2.msra.mxu0 0.0
  %474 = vmatprep.subr.mxu0 0.0
  %475 = vmatpush2.msra.mxu0 0.0
  %476 = vmatprep.subr.mxu0 0.0
  %477 = vmatpush2.msra.mxu0 0.0
  %478 = vmatprep.subr.mxu0 0.0
  %479 = vmatpush2.msra.mxu0 0.0
  %480 = vmatprep.subr.mxu0 0.0
  %481 = vmatpush2.msra.mxu0 0.0
  %482 = vmatprep.subr.mxu0 0.0
  %483 = vmatpush2.msra.mxu0 0.0
  %484 = vmatprep.mubr.f32.mxu0 0.0
  %485 = vmatmul.mubr.f32.gmra.mxu0 %v415
  %v486 = vpop.f32.mrf.mxu0
  %v487 = vadd.f32 %v405, %v486
  %v488 = vpop.f32.mrf.mxu0
  %489 = vmatprep.mubr.f32.mxu0 0.0
  %490 = vmatmul.mubr.f32.gmra.mxu0 %v418
  %v491 = vpop.f32.mrf.mxu0
  %v492 = vadd.f32 %v410, %v491
  %v493 = vpop.f32.mrf.mxu0
  %494 = vdwg.mxu0
  %v495 = vld [vmem:[%s1 + $0x98] sm:$0x1]
  %v496 = vlaneseq
  %v497 = vshrl.u32 %v496, 7
  %v498 = vsub.s32 0, %v497
  %v499 = vrot.slane %v495, %v498
  %v500 = vadd.f32 %v487, %v499
  %v501 = vadd.f32 %v492, %v499
  %v502 = vmax.f32 %v500, 0.0
  %v503 = vmax.f32 %v501, 0.0
  %v504 = vld [vmem:[%s1 + $0xa0] sm:$0xff]
  %v505 = vld [vmem:[%s1 + $0xa8] sm:$0xff]
  %v506 = vld [vmem:[%s1 + $0xb0] sm:$0xff]
  %v507 = vld [vmem:[%s1 + $0xb8] sm:$0x1]
  %v508 = vlaneseq
  %v509 = vshrl.u32 %v508, 7
  %v510 = vsub.s32 0, %v509
  %v511 = vrot.slane %v507, %v510
  %v513 = vsel %vm219, %v502, 0
  %v516 = vsel %vm219, %v503, 0
  %518 = vmatprep.subr.mxu0 0.0
  %519 = vmatpush1.msra.mxu0 0.0
  %520 = vmatprep.subr.mxu0 0.0
  %521 = vmatpush1.msra.mxu0 0.0
  %522 = vmatprep.subr.mxu0 0.0
  %523 = vmatpush1.msra.mxu0 0.0
  %524 = vmatprep.subr.mxu0 0.0
  %525 = vmatpush1.msra.mxu0 0.0
  %526 = vmatprep.subr.mxu0 0.0
  %527 = vmatpush1.msra.mxu0 0.0
  %528 = vmatprep.subr.mxu0 0.0
  %529 = vmatpush1.msra.mxu0 0.0
  %530 = vmatprep.subr.mxu0 0.0
  %531 = vmatpush1.msra.mxu0 0.0
  %532 = vmatprep.subr.mxu0 0.0
  %533 = vmatpush1.msra.mxu0 0.0
  %534 = vmatprep.subr.mxu0 0.0
  %535 = vmatpush1.msra.mxu0 0.0
  %536 = vmatprep.subr.mxu0 0.0
  %537 = vmatpush1.msra.mxu0 0.0
  %538 = vmatprep.subr.mxu0 0.0
  %539 = vmatpush1.msra.mxu0 0.0
  %540 = vmatprep.subr.mxu0 0.0
  %541 = vmatpush1.msra.mxu0 0.0
  %542 = vmatprep.subr.mxu0 0.0
  %543 = vmatpush1.msra.mxu0 0.0
  %544 = vmatprep.subr.mxu0 0.0
  %545 = vmatpush1.msra.mxu0 %v506
  %546 = vmatprep.subr.mxu0 0.0
  %547 = vmatpush1.msra.mxu0 %v505
  %548 = vmatprep.subr.mxu0 0.0
  %549 = vmatpush1.msra.mxu0 %v504
  %550 = vmatprep.subr.mxu0 0.0
  %551 = vmatpush2.msra.mxu0 0.0
  %552 = vmatprep.subr.mxu0 0.0
  %553 = vmatpush2.msra.mxu0 0.0
  %554 = vmatprep.subr.mxu0 0.0
  %555 = vmatpush2.msra.mxu0 0.0
  %556 = vmatprep.subr.mxu0 0.0
  %557 = vmatpush2.msra.mxu0 0.0
  %558 = vmatprep.subr.mxu0 0.0
  %559 = vmatpush2.msra.mxu0 0.0
  %560 = vmatprep.subr.mxu0 0.0
  %561 = vmatpush2.msra.mxu0 0.0
  %562 = vmatprep.subr.mxu0 0.0
  %563 = vmatpush2.msra.mxu0 0.0
  %564 = vmatprep.subr.mxu0 0.0
  %565 = vmatpush2.msra.mxu0 0.0
  %566 = vmatprep.subr.mxu0 0.0
  %567 = vmatpush2.msra.mxu0 0.0
  %568 = vmatprep.subr.mxu0 0.0
  %569 = vmatpush2.msra.mxu0 0.0
  %570 = vmatprep.subr.mxu0 0.0
  %571 = vmatpush2.msra.mxu0 0.0
  %572 = vmatprep.subr.mxu0 0.0
  %573 = vmatpush2.msra.mxu0 0.0
  %574 = vmatprep.subr.mxu0 0.0
  %575 = vmatpush2.msra.mxu0 0.0
  %576 = vmatprep.subr.mxu0 0.0
  %577 = vmatpush2.msra.mxu0 0.0
  %578 = vmatprep.subr.mxu0 0.0
  %579 = vmatpush2.msra.mxu0 0.0
  %580 = vmatprep.subr.mxu0 0.0
  %581 = vmatpush2.msra.mxu0 0.0
  %582 = vmatprep.mubr.f32.mxu0 0.0
  %583 = vmatmul.mubr.f32.gmra.mxu0 %v513
  %v584 = vpop.f32.mrf.mxu0
  %v585 = vadd.f32 %v511, %v584
  %v586 = vpop.f32.mrf.mxu0
  %587 = vmatprep.mubr.f32.mxu0 0.0
  %588 = vmatmul.mubr.f32.gmra.mxu0 %v516
  %v589 = vpop.f32.mrf.mxu0
  %v590 = vadd.f32 %v511, %v589
  %v591 = vpop.f32.mrf.mxu0
  %592 = vdwg.mxu0
  %vm593 = vcmp.gt.f32.partialorder %v585, 0.0
  %vm594 = vcmp.gt.f32.partialorder %v590, 0.0
  %v595 = vmul.f32 %v585, 0.2
  %v596 = vmul.f32 %v590, 0.2
  %v597 = vsel %vm593, %v585, %v595
  %v598 = vsel %vm594, %v590, %v596
  %v599 = vld [vmem:[%s1 + $0xc0] sm:$0xff]
  %v600 = vld [vmem:[%s1 + $0xc8] sm:$0xff]
  %v601 = vld [vmem:[%s1 + $0xd0] sm:$0xff]
  %v602 = vld [vmem:[%s1 + $0xd8] sm:$0xff]
  %v603 = vld [vmem:[%s1 + $0xe0] sm:$0x1]
  %v604 = vlaneseq
  %v605 = vshrl.u32 %v604, 7
  %v606 = vsub.s32 0, %v605
  %v607 = vrot.slane %v603, %v606
  %v609 = vsel %vm123, %v597, 0
  %v612 = vsel %vm123, %v598, 0
  %614 = vmatprep.subr.mxu0 0.0
  %615 = vmatpush1.msra.mxu0 0.0
  %616 = vmatprep.subr.mxu0 0.0
  %617 = vmatpush1.msra.mxu0 0.0
  %618 = vmatprep.subr.mxu0 0.0
  %619 = vmatpush1.msra.mxu0 0.0
  %620 = vmatprep.subr.mxu0 0.0
  %621 = vmatpush1.msra.mxu0 0.0
  %622 = vmatprep.subr.mxu0 0.0
  %623 = vmatpush1.msra.mxu0 0.0
  %624 = vmatprep.subr.mxu0 0.0
  %625 = vmatpush1.msra.mxu0 0.0
  %626 = vmatprep.subr.mxu0 0.0
  %627 = vmatpush1.msra.mxu0 0.0
  %628 = vmatprep.subr.mxu0 0.0
  %629 = vmatpush1.msra.mxu0 0.0
  %630 = vmatprep.subr.mxu0 0.0
  %631 = vmatpush1.msra.mxu0 0.0
  %632 = vmatprep.subr.mxu0 0.0
  %633 = vmatpush1.msra.mxu0 0.0
  %634 = vmatprep.subr.mxu0 0.0
  %635 = vmatpush1.msra.mxu0 0.0
  %636 = vmatprep.subr.mxu0 0.0
  %637 = vmatpush1.msra.mxu0 0.0
  %638 = vmatprep.subr.mxu0 0.0
  %639 = vmatpush1.msra.mxu0 %v602
  %640 = vmatprep.subr.mxu0 0.0
  %641 = vmatpush1.msra.mxu0 %v601
  %642 = vmatprep.subr.mxu0 0.0
  %643 = vmatpush1.msra.mxu0 %v600
  %644 = vmatprep.subr.mxu0 0.0
  %645 = vmatpush1.msra.mxu0 %v599
  %646 = vmatprep.subr.mxu0 0.0
  %647 = vmatpush2.msra.mxu0 0.0
  %648 = vmatprep.subr.mxu0 0.0
  %649 = vmatpush2.msra.mxu0 0.0
  %650 = vmatprep.subr.mxu0 0.0
  %651 = vmatpush2.msra.mxu0 0.0
  %652 = vmatprep.subr.mxu0 0.0
  %653 = vmatpush2.msra.mxu0 0.0
  %654 = vmatprep.subr.mxu0 0.0
  %655 = vmatpush2.msra.mxu0 0.0
  %656 = vmatprep.subr.mxu0 0.0
  %657 = vmatpush2.msra.mxu0 0.0
  %658 = vmatprep.subr.mxu0 0.0
  %659 = vmatpush2.msra.mxu0 0.0
  %660 = vmatprep.subr.mxu0 0.0
  %661 = vmatpush2.msra.mxu0 0.0
  %662 = vmatprep.subr.mxu0 0.0
  %663 = vmatpush2.msra.mxu0 0.0
  %664 = vmatprep.subr.mxu0 0.0
  %665 = vmatpush2.msra.mxu0 0.0
  %666 = vmatprep.subr.mxu0 0.0
  %667 = vmatpush2.msra.mxu0 0.0
  %668 = vmatprep.subr.mxu0 0.0
  %669 = vmatpush2.msra.mxu0 0.0
  %670 = vmatprep.subr.mxu0 0.0
  %671 = vmatpush2.msra.mxu0 0.0
  %672 = vmatprep.subr.mxu0 0.0
  %673 = vmatpush2.msra.mxu0 0.0
  %674 = vmatprep.subr.mxu0 0.0
  %675 = vmatpush2.msra.mxu0 0.0
  %676 = vmatprep.subr.mxu0 0.0
  %677 = vmatpush2.msra.mxu0 0.0
  %678 = vmatprep.mubr.f32.mxu0 0.0
  %679 = vmatmul.mubr.f32.gmra.mxu0 %v609
  %v680 = vpop.f32.mrf.mxu0
  %v681 = vadd.f32 %v607, %v680
  %v682 = vpop.f32.mrf.mxu0
  %683 = vmatprep.mubr.f32.mxu0 0.0
  %684 = vmatmul.mubr.f32.gmra.mxu0 %v612
  %v685 = vpop.f32.mrf.mxu0
  %v686 = vadd.f32 %v607, %v685
  %v687 = vpop.f32.mrf.mxu0
  %688 = vdwg.mxu0
  %vm689 = vcmask 130048
  %690 = vst.msk [vmem:[%s2] sm:$0xff] %vm689, %v681
  %691 = vst.msk [vmem:[%s2 + $0x8] sm:$0xff] %vm689, %v686
  // Predicated region
  $region10: #{vae2_forward.1} parent=0 // pred_check
    _
  $region11: #{vae2_forward.1} parent=0 // pred_check_branch
    %693 = sbr.rel (0) target = $region13
  $region12: #{vae2_forward.1} parent=0 // pred_region
    _
  $region13: #{vae2_forward.1} parent=0 // pred_fallthru
    _
  // Predicated region
  $region14: #{vae2_forward.1} parent=0 // pred_check
    _
  $region15: #{vae2_forward.1} parent=0 // pred_check_branch
    %695 = sbr.rel (0) target = $region17
  $region16: #{vae2_forward.1} parent=0 // pred_region
    _
  $region17: #{vae2_forward.1} parent=0 // pred_fallthru
    _

</llo_original>
